<compile_context>
chip_gen: v7x
topology: tpu7x:2x2x1
jax: 0.10.0
libtpu: 0.0.40
codegen_flags: <defaults>
</compile_context>

<pallas_src>
import functools

import jax
import jax.numpy as jnp
from jax.experimental import pallas as pl
from jax.experimental.pallas import tpu as pltpu


def _round_up(x, m):
    return (x + m - 1) // m * m


def _sublane_multiple(dtype):
    # Packed sublane tile: 8 rows for 32-bit, 16 for bf16/f16, 32 for 8-bit.
    itemsize = jnp.dtype(dtype).itemsize
    return max(8, 8 * (4 // max(itemsize, 1)))


def _adver_style_kernel(x_ref, p_ref, o_ref, *, tr, hw, eps):
    # x_ref: (tr, HW) tile of the flattened (B*C, H*W) activations.
    # p_ref: (BC_pad, 2) adversarial params; resident in VMEM for the whole
    #        grid (constant index_map), sliced per step below.
    r0 = pl.multiple_of(pl.program_id(0) * tr, 8)
    p = p_ref[pl.ds(r0, tr), :].astype(jnp.float32)        # (tr, 2)
    mu_adv = p[:, 0:1]
    var_adv = p[:, 1:2]

    x = x_ref[...].astype(jnp.float32)                     # (tr, HW)
    mu = jnp.mean(x, axis=-1, keepdims=True)               # (tr, 1)
    diff = x - mu
    # torch.var defaults to unbiased (N-1) normalization over the spatial dims;
    # guard the degenerate H*W == 1 case.
    denom = float(max(hw - 1, 1))
    var = jnp.sum(diff * diff, axis=-1, keepdims=True) / denom

    sig = jnp.sqrt(var + eps)
    inv_sig = jax.lax.rsqrt(var + eps)                     # EUP slot; == 1/sig
    sig_adv = jnp.sqrt(var_adv + eps)

    # reverse_grad / detach are autograd-only; identity in the forward pass.
    out = (sig + sig_adv) * (diff * inv_sig) + (mu + mu_adv)
    o_ref[...] = out.astype(o_ref.dtype)


def adver_style_block_apply(x, params, *, eps=1e-6,
                            target_block_bytes=2 << 20,
                            alias_input=False):
    """x: (B, C, H, W); params: (2, B, C)  -> (B, C, H, W)."""
    B, C, H, W = x.shape
    HW = H * W
    BC = B * C
    itemsize = jnp.dtype(x.dtype).itemsize
    sub = _sublane_multiple(x.dtype)

    # Row tile: as many rows as fit the per-block byte budget, rounded to the
    # dtype's packed-sublane multiple, never exceeding the (padded) row count.
    row_bytes = max(HW * itemsize, 1)
    tr = max(1, target_block_bytes // row_bytes)
    tr = max(sub, (tr // sub) * sub)
    tr = min(tr, _round_up(BC, sub))
    # Prefer >=2 grid steps when there is enough work so both v7x TensorCores
    # get a shard (dimension_semantics=("parallel",)).
    if BC >= 2 * sub and tr >= BC:
        tr = _round_up(pl.cdiv(BC, 2), sub)

    grid = pl.cdiv(BC, tr)
    bc_pad = grid * tr

    x2d = x.reshape(BC, HW)
    # Fuse (mu_adv, var_adv) into one (BC_pad, 2) f32 array, zero-padded so the
    # in-kernel dynamic row slice never reads past the logical extent.
    p2d = jnp.transpose(params.reshape(2, BC)).astype(jnp.float32)   # (BC, 2)
    if bc_pad != BC:
        p2d = jnp.pad(p2d, ((0, bc_pad - BC), (0, 0)))

    # Explicit VMEM budget: double-buffered in + double-buffered out + resident
    # params + slack.  Capped at 48 MiB so it stays under v7x's 64 MiB VMEM.
    block_bytes = tr * HW * itemsize
    vmem_bytes = 4 * block_bytes + bc_pad * 2 * 4 + (1 << 20)
    vmem_limit = int(min(max(vmem_bytes, 16 << 20), 48 << 20))
    # TODO(synk): for very large H*W (a single sub-row block > ~48 MiB) add a
    # second "arbitrary" grid axis over HW chunks with sum/sumsq accumulators.

    kernel = functools.partial(_adver_style_kernel, tr=tr, hw=HW, eps=eps)
    out2d = pl.pallas_call(
        kernel,
        out_shape=jax.ShapeDtypeStruct((BC, HW), x.dtype),
        grid_spec=pltpu.PrefetchScalarGridSpec(
            num_scalar_prefetch=0,
            grid=(grid,),
            in_specs=[
                pl.BlockSpec((tr, HW), lambda i: (i, 0)),
                # Constant index_map -> block fetched once, stays resident.
                pl.BlockSpec((bc_pad, 2), lambda i: (0, 0)),
            ],
            out_specs=pl.BlockSpec((tr, HW), lambda i: (i, 0)),
        ),
        compiler_params=pltpu.CompilerParams(
            dimension_semantics=("parallel",),
            vmem_limit_bytes=vmem_limit,
        ),
        # Optional: alias x's buffer with the output (same shape/dtype) to
        # halve the HBM footprint of large activations.  Off by default so the
        # input remains freely reusable by the caller.
        input_output_aliases=({0: 0} if alias_input else {}),
    )(x2d, p2d)
    return out2d.reshape(B, C, H, W)


class AdverStyleEncoder:
    """JAX/Pallas port of MedSegDGSSL AdverStyleEncoder (forward pass only)."""

    def __init__(self, batch_size, channels, prob=0.5, adver_block=None):
        self.batch_size = batch_size
        self.channels = list(channels)
        self.prob = prob
        if adver_block is None:
            adver_block = [True] * len(self.channels)
        self.adver_flags = list(adver_block)
        # nn.Parameter(torch.zeros(2, batch_size, channel)) -> zeros.
        self.params = [
            jnp.zeros((2, batch_size, c), jnp.float32) if self.adver_flags[i] else None
            for i, c in enumerate(self.channels)
        ]
        self.training = True

    def reset(self):
        self.params = [
            jnp.zeros_like(p) if p is not None else None for p in self.params
        ]

    def forward(self, x, i, rng=None):
        if not self.adver_flags[i]:
            return x                      # nn.Identity()
        if not self.training:
            return x
        # TODO(synk): the stochastic skip (np.random.random() > prob) is
        # host-side Python control flow; reproduced here outside the kernel.
        if rng is not None and float(rng.random()) > self.prob:
            return x
        return adver_style_block_apply(x, self.params[i])

    __call__ = forward


def _reference_block(x, params, eps=1e-6):
    mu = x.mean(axis=(2, 3), keepdims=True)
    var = x.var(axis=(2, 3), keepdims=True, ddof=1)
    mu_adv = params[0].reshape(mu.shape)
    var_adv = params[1].reshape(var.shape)
    sig = jnp.sqrt(var + eps)
    sig_adv = jnp.sqrt(var_adv + eps)
    x_normed = (x - mu) / sig
    return (sig + sig_adv) * x_normed + (mu + mu_adv)


if __name__ == "__main__":
    key = jax.random.PRNGKey(0)
    k1, k2, k3, k4 = jax.random.split(key, 4)

    # --- test 1: encoder path, module-like shapes ---------------------------
    B, C, H, W = 2, 4, 16, 16
    x = jax.random.normal(k1, (B, C, H, W), dtype=jnp.float32)
    enc = AdverStyleEncoder(batch_size=B, channels=[C, 2 * C], prob=0.5)
    enc.training = True
    raw = jax.random.normal(k2, (2, B, C), dtype=jnp.float32)
    # Non-zero adversarial params; keep the "variance" half non-negative so
    # sqrt(var_adv + eps) stays real (matches well-behaved trained params).
    enc.params[0] = jnp.stack([0.1 * raw[0], jnp.abs(0.2 * raw[1])])

    out = jax.block_until_ready(enc.forward(x, 0))   # forced-apply path
    ref = _reference_block(x, enc.params[0])
    assert out.shape == x.shape and out.dtype == x.dtype
    assert jnp.allclose(out, ref, atol=1e-4, rtol=1e-4)

    # --- test 2: non-divisible B*C, multi-step grid with padded tail block ---
    B2, C2, H2, W2 = 3, 5, 8, 8
    x2 = jax.random.normal(k3, (B2, C2, H2, W2), dtype=jnp.float32)
    raw2 = jax.random.normal(k4, (2, B2, C2), dtype=jnp.float32)
    p2 = jnp.stack([0.1 * raw2[0], jnp.abs(0.2 * raw2[1])])
    out2 = jax.block_until_ready(
        adver_style_block_apply(x2, p2, target_block_bytes=2048))
    ref2 = _reference_block(x2, p2)
    assert jnp.allclose(out2, ref2, atol=1e-4, rtol=1e-4)

    print("KERNEL_OK")
</pallas_src>

<mosaic_0001>
module attributes {stable_mosaic.version = 11 : i64} {
  func.func @_adver_style_kernel(%arg0: i32, %arg1: memref<8x256xf32, #tpu.memory_space<vmem>>, %arg2: memref<8x2xf32, #tpu.memory_space<vmem>>, %arg3: memref<8x256xf32, #tpu.memory_space<vmem>>) attributes {dimension_semantics = [#tpu.dimension_semantics<parallel>], iteration_bounds = array<i64: 1>, scalar_prefetch = 0 : i64, scratch_operands = 0 : i64, tpu.core_type = #tpu.core_type<tc>, window_params = [{transform_indices = @transform_0, window_bounds = array<i64: 8, 256>}, {pipeline_mode = #tpu.pipeline_mode<synchronous>, transform_indices = @transform_1, window_bounds = array<i64: 8, 2>}, {transform_indices = @transform_2, window_bounds = array<i64: 8, 256>}]} {
    %c8_i32 = arith.constant 8 : i32
    %0 = arith.muli %arg0, %c8_i32 : i32
    %1 = tpu.assume_multiple %0, 8 : i32
    %2 = arith.index_cast %1 : i32 to index
    %c0 = arith.constant 0 : index
    %3 = vector.load %arg2[%2, %c0] : memref<8x2xf32, #tpu.memory_space<vmem>>, vector<8x2xf32>
    %4 = vector.extract_strided_slice %3 {offsets = [0, 0], sizes = [8, 1], strides = [1, 1]} : vector<8x2xf32> to vector<8x1xf32>
    %5 = vector.extract_strided_slice %3 {offsets = [0, 1], sizes = [8, 1], strides = [1, 1]} : vector<8x2xf32> to vector<8x1xf32>
    %c0_0 = arith.constant 0 : index
    %c0_1 = arith.constant 0 : index
    %6 = vector.load %arg1[%c0_0, %c0_1] : memref<8x256xf32, #tpu.memory_space<vmem>>, vector<8x256xf32>
    %cst = arith.constant dense<0.000000e+00> : vector<8xf32>
    %7 = vector.multi_reduction <add>, %6, %cst [1] : vector<8x256xf32> to vector<8xf32>
    %8 = vector.shape_cast %7 : vector<8xf32> to vector<8x1xf32>
    %cst_2 = arith.constant 2.560000e+02 : f32
    %9 = vector.broadcast %cst_2 : f32 to vector<8x1xf32>
    %10 = arith.divf %8, %9 : vector<8x1xf32>
    %11 = vector.broadcast %10 : vector<8x1xf32> to vector<8x256xf32>
    %12 = arith.subf %6, %11 : vector<8x256xf32>
    %13 = arith.mulf %12, %12 : vector<8x256xf32>
    %cst_3 = arith.constant dense<0.000000e+00> : vector<8xf32>
    %14 = vector.multi_reduction <add>, %13, %cst_3 [1] : vector<8x256xf32> to vector<8xf32>
    %15 = vector.shape_cast %14 : vector<8xf32> to vector<8x1xf32>
    %cst_4 = arith.constant 2.550000e+02 : f32
    %16 = vector.broadcast %cst_4 : f32 to vector<8x1xf32>
    %17 = arith.divf %15, %16 : vector<8x1xf32>
    %cst_5 = arith.constant 9.99999997E-7 : f32
    %18 = vector.broadcast %cst_5 : f32 to vector<8x1xf32>
    %19 = arith.addf %17, %18 : vector<8x1xf32>
    %20 = math.sqrt %19 : vector<8x1xf32>
    %cst_6 = arith.constant 9.99999997E-7 : f32
    %21 = vector.broadcast %cst_6 : f32 to vector<8x1xf32>
    %22 = arith.addf %17, %21 : vector<8x1xf32>
    %23 = math.rsqrt %22 : vector<8x1xf32>
    %cst_7 = arith.constant 9.99999997E-7 : f32
    %24 = vector.broadcast %cst_7 : f32 to vector<8x1xf32>
    %25 = arith.addf %5, %24 : vector<8x1xf32>
    %26 = math.sqrt %25 : vector<8x1xf32>
    %27 = arith.addf %20, %26 : vector<8x1xf32>
    %28 = vector.broadcast %23 : vector<8x1xf32> to vector<8x256xf32>
    %29 = arith.mulf %12, %28 : vector<8x256xf32>
    %30 = vector.broadcast %27 : vector<8x1xf32> to vector<8x256xf32>
    %31 = arith.mulf %30, %29 : vector<8x256xf32>
    %32 = arith.addf %10, %4 : vector<8x1xf32>
    %33 = vector.broadcast %32 : vector<8x1xf32> to vector<8x256xf32>
    %34 = arith.addf %31, %33 : vector<8x256xf32>
    %c0_8 = arith.constant 0 : index
    %c0_9 = arith.constant 0 : index
    %35 = vector.load %arg3[%c0_8, %c0_9] : memref<8x256xf32, #tpu.memory_space<vmem>>, vector<8x256xf32>
    tpu.vector_store %arg3[%c0_8, %c0_9], %34 {strides = array<i32>} : memref<8x256xf32, #tpu.memory_space<vmem>>, vector<8x256xf32>,
    return
  }
  func.func @transform_0(%arg0: i32) -> (i32, i32) {
    %c0_i32 = arith.constant 0 : i32
    %c0_i32_0 = arith.constant 0 : i32
    return %arg0, %c0_i32 : i32, i32
  }
  func.func @transform_1(%arg0: i32) -> (i32, i32) {
    %c0_i32 = arith.constant 0 : i32
    %c0_i32_0 = arith.constant 0 : i32
    %c0_i32_1 = arith.constant 0 : i32
    return %c0_i32, %c0_i32_0 : i32, i32
  }
  func.func @transform_2(%arg0: i32) -> (i32, i32) {
    %c0_i32 = arith.constant 0 : i32
    %c0_i32_0 = arith.constant 0 : i32
    return %arg0, %c0_i32 : i32, i32
  }
}

</mosaic_0001>

<llo_original>
// kernel: tpu_custom_call.1
$region0: #{tpu_custom_call.1}
  #allocation0 [shape = 'u32[]', space=smem, size = 0x4, offset = 0x4, fixed_abs, tag = 'smem constant byte address 0x4 - core index']
  #allocation1 [shape = 'u32[144,128]{1,0:T(1,128)}', space=vmem, size = 0x12000, scoped, tag = 'internal scratch']
  %s0 = inlined_call_operand.hbm [shape: f32[8,256], index: 0, kind: input, shape index: {}]
  %s1 = inlined_call_operand.vmem [shape: f32[8,2], index: 1, kind: input, shape index: {}]
  %s2 = inlined_call_operand.hbm [shape: f32[8,256], index: 2, kind: output, shape index: {}]
  %s3 = sld [smem:[#allocation0]]
  $region22: #{tpu_custom_call.1} parent=0
    _
  %s5 = ssub.s32 1, %s3
  %s6 = scalar_select 0, %s5, %s3
  $region1: #{tpu_custom_call.1} parent=0
    #allocation2 [shape = 'u8[8192]{0}', space=vmem, size = 0x2000, scoped, tag = 'input window, operand 0, single buffered']
    #allocation3 [shape = 's32[1]{0}', space=sflag, size = 0x4, scoped, tag = 'scoped memory for tpu_custom_call.1']
    #allocation4 [shape = 's32[1]{0}', space=sflag, size = 0x4, scoped, tag = 'scoped memory for tpu_custom_call.1']
    #allocation5 [shape = 'u8[8192]{0}', space=vmem, size = 0x2000, scoped, tag = 'output window, operand 0, single buffered']
    %7 = vsyncpa [#allocation3], 0
    %8 = vsyncpa [#allocation4], 0
    // Predicated region
    $region2: #{tpu_custom_call.1} parent=1 // pred_check
      _
    $region3: #{tpu_custom_call.1} parent=1 // pred_check_branch
      %10 = sbr.rel (0) target = $region5
    $region4: #{tpu_custom_call.1} parent=1 // pred_region
      %s12 = ssub.s32 256, 256
      %13 = vsyncadd [#allocation3], %s12
      %s15 = sshll.u32 [#allocation2], 4
      %s16 = int_to_ptr.vmem [resolvable:$true] %s15
      %18 = dma.hbm_to_vmem [thread:$0]  %s0, 256, %s16, [#allocation3]
    $region5: #{tpu_custom_call.1} parent=1 // pred_fallthru
      _
    // Predicated region
    $region6: #{tpu_custom_call.1} parent=1 // pred_check
      _
    $region7: #{tpu_custom_call.1} parent=1 // pred_check_branch
      %20 = sbr.rel (0) target = $region9
    $region8: #{tpu_custom_call.1} parent=1 // pred_region
      _
    $region9: #{tpu_custom_call.1} parent=1 // pred_fallthru
      _
    // Predicated region
    $region10: #{tpu_custom_call.1} parent=1 // pred_check
      _
    $region11: #{tpu_custom_call.1} parent=1 // pred_check_branch
      %22 = sbr.rel (0) target = $region13
    $region12: #{tpu_custom_call.1} parent=1 // pred_region
      %23 = dma.done [#allocation3], 256
    $region13: #{tpu_custom_call.1} parent=1 // pred_fallthru
      _
    %s24 = smul.u32 0, 8
    %s25 = scalar_lea.vmem %s1, %s24
    %v26 = vld [vmem:[%s25] sm:$0xff]
    %v27 = vld [vmem:[#allocation2] sm:$0xff]
    %v28 = vld [vmem:[#allocation2 + $0x8] sm:$0xff]
    %v29 = vadd.f32 %v27, %v28
    %30 = vadd.xlane.f32.xlu0 %v29
    %v31 = vpop.xlane.xlu0 %30
    %v32 = vrcp.pop 256.0
    %v33 = vmul.f32 %v31, %v32
    %v34 = vsub.f32 %v27, %v33
    %v35 = vsub.f32 %v28, %v33
    %v36 = vmul.f32 %v34, %v34
    %v37 = vmul.f32 %v35, %v35
    %v38 = vadd.f32 %v36, %v37
    %39 = vadd.xlane.f32.xlu0 %v38
    %v40 = vpop.xlane.xlu0 %39
    %v41 = vrcp.pop 255.0
    %v42 = vmul.f32 %v40, %v41
    %v43 = vadd.f32 %v42, 1e-06
    %v44 = vrsqrt.pop %v43
    %v45 = vmul.f32 %v43, %v44
    %vm46 = vcmp.eq.f32.partialorder %v43, inf
    %v47 = vsel %vm46, %v43, %v45
    %vm48 = vcmp.eq.f32.partialorder %v43, 0.0
    %v49 = vand.u32 %v43, 2147483648
    %v50 = vsel %vm48, %v49, %v47
    %v51 = vrsqrt.pop %v43
    %v52 = vadd.f32 %v26, 1e-06
    %v53 = vrsqrt.pop %v52
    %v54 = vmul.f32 %v52, %v53
    %vm55 = vcmp.eq.f32.partialorder %v52, inf
    %v56 = vsel %vm55, %v52, %v54
    %vm57 = vcmp.eq.f32.partialorder %v52, 0.0
    %v58 = vand.u32 %v52, 2147483648
    %v59 = vsel %vm57, %v58, %v56
    %v60 = vadd.f32 %v50, %v59
    %v61 = vmul.f32 %v34, %v51
    %v62 = vmul.f32 %v35, %v51
    %64 = vset.pattern.permute.xlu0 1
    %65 = vperm.xlu0 %64, %v60
    %v66 = vpop.permute.xlu0 %65
    %v68 = vmul.f32 %v66, %v61
    %v69 = vmul.f32 %v66, %v62
    %v70 = vadd.f32 %v33, %v26
    %72 = vset.pattern.permute.xlu0 0
    %73 = vperm.xlu0 %72, %v70
    %v74 = vpop.permute.xlu0 %73
    %v76 = vadd.f32 %v68, %v74
    %v77 = vadd.f32 %v69, %v74
    %78 = vst [vmem:[#allocation5] sm:$0xff] %v76
    %79 = vst [vmem:[#allocation5 + $0x8] sm:$0xff] %v77
    // Predicated region
    $region14: #{tpu_custom_call.1} parent=1 // pred_check
      _
    $region15: #{tpu_custom_call.1} parent=1 // pred_check_branch
      %81 = sbr.rel (0) target = $region17
    $region16: #{tpu_custom_call.1} parent=1 // pred_region
      %s83 = ssub.s32 256, 256
      %84 = vsyncadd [#allocation4], %s83
      %s86 = sshll.u32 [#allocation5], 4
      %s87 = int_to_ptr.vmem [resolvable:$true] %s86
      %89 = dma.vmem_to_hbm [thread:$0]  %s87, 256, %s2, [#allocation4]
    $region17: #{tpu_custom_call.1} parent=1 // pred_fallthru
      _
    // Predicated region
    $region18: #{tpu_custom_call.1} parent=1 // pred_check
      _
    $region19: #{tpu_custom_call.1} parent=1 // pred_check_branch
      %91 = sbr.rel (0) target = $region21
    $region20: #{tpu_custom_call.1} parent=1 // pred_region
      %92 = dma.done [#allocation4], 256
    $region21: #{tpu_custom_call.1} parent=1 // pred_fallthru
      _
    %93 = vsyncpa [#allocation3], 1
    %94 = vsyncpa [#allocation4], 1

</llo_original>
